<compile_context>
chip_gen: v5e
topology: v5e:2x2
jax: 0.10.0
libtpu: 0.0.40
codegen_flags: <defaults>
</compile_context>

<pallas_src>
import jax
import jax.numpy as jnp
from jax import lax
from jax.experimental import pallas as pl
from jax.experimental.pallas import tpu as pltpu


class MasterConfig:
    IN_CHANNELS = 4
    IMG_WIDTH = 16
    IMG_HEIGHT = 16
    NUM_CLASSES = 10


HYPERPARAMS = dict(
    dropout_rates=[0.1],
    conv_layers_dims=[8, 16],
    fc_layers_dims=[32],
    batch_norm=False,          # BatchNorm branch disabled in this config
    kernel_size=3,
    stride=1,
    padding=1,
    pooling_size=2,
    activation_fn="relu",
    weight_init_conv="normal",
    weight_init_fc="normal",
)

# ---- static sizes implied by the config ----
H = MasterConfig.IMG_HEIGHT      # 16
W = MasterConfig.IMG_WIDTH       # 16
C_IN = MasterConfig.IN_CHANNELS  # 4
C1 = HYPERPARAMS["conv_layers_dims"][0]   # 8
C2 = HYPERPARAMS["conv_layers_dims"][1]   # 16
H1, W1 = H, W                    # conv1 output (k=3, s=1, p=1)
HP1, WP1 = H1 // 2, W1 // 2      # 8, 8  after 2x2 pool
H2, W2 = HP1, WP1                # conv2 output
HP2, WP2 = H2 // 2, W2 // 2      # 4, 4  after 2x2 pool
FC_IN = C2 * HP2 * WP2           # 256
FC_HID = HYPERPARAMS["fc_layers_dims"][0]  # 32
NCLS = MasterConfig.NUM_CLASSES  # 10

OUT_LANES = 128                  # lane-dense (zero-padded) logits width

ROWS1 = H + 2                    # per-image row pitch in the conv1 padded frame (18)
ROWS2 = HP1 + 2                  # per-image row pitch in the conv2 padded frame (10)


# ----------------------------------------------------------------------------
# Fused kernel: one grid step runs the full forward pass for `nb` images stacked
# along sublanes.  Activation layout: rows = (image, h), lanes = w*C + c (permuted
# so the 2x2 W-pool is a max of the two 64-lane halves).
# ----------------------------------------------------------------------------
def _make_kernel(nb):
    M1 = nb * ROWS1 - 2          # conv1 matmul rows (valid rows per image b: [ROWS1*b, ROWS1*b+15])
    M2 = nb * ROWS2 - 2          # conv2 matmul rows (valid rows per image b: [ROWS2*b, ROWS2*b+7])
    N1 = nb * ROWS1 // 2 - 1     # rows of the stride-2 H-pool1 read
    N2 = nb * ROWS2 // 2 - 1     # rows of the stride-2 H-pool2 read
    PITCH1 = ROWS1 // 2          # 9: per-image row pitch of pooled conv1 rows
    PITCH2 = ROWS2 // 2          # 5: per-image row pitch of pooled conv2 rows

    def kernel(x_ref, w1_ref, b1_ref, w2_ref, b2_ref,
               wf1_ref, bf1_ref, wf2_ref, bf2_ref,
               o_ref,
               xpad1, y1, xpad2, y2):
        f32 = jnp.float32
        bf16 = jnp.bfloat16

        # Zero the padded frames once; the interior is fully rewritten every step and the
        # zero borders persist in scratch across grid steps.
        @pl.when(pl.program_id(0) == 0)
        def _():
            xpad1[...] = jnp.zeros_like(xpad1)
            xpad2[...] = jnp.zeros_like(xpad2)

        # ---------------- stage inputs into the conv1 padded frame ----------------
        for b in range(nb):
            r0 = ROWS1 * b + 1
            xpad1[r0:r0 + H, C_IN:C_IN + W * C_IN] = x_ref[b]

        # ---------------- conv1 (3x3, pad 1): 3 matmuls, kw absorbed -------------
        acc1 = None
        for kh in range(3):
            lhs = xpad1[kh:kh + M1, :].astype(bf16)                   # (M1, 72)
            t = jnp.dot(lhs, w1_ref[kh], preferred_element_type=f32)  # MXU, f32 acc
            acc1 = t if acc1 is None else acc1 + t
        acc1 = jnp.maximum(acc1 + b1_ref[...], 0.0)                   # bias + ReLU (f32)
        # acc1 lanes: (w % 2)*64 + (w // 2)*C1 + c  (even/odd-w interleave baked into weights)

        # ---------------- maxpool1 (2x2): W-pool in registers, then stride-2 H-pool
        y1[...] = jnp.maximum(acc1[:, :WP1 * C1], acc1[:, WP1 * C1:])       # (M1, 64)
        hmax1 = jnp.maximum(y1[pl.ds(0, N1, 2), :], y1[pl.ds(1, N1, 2), :])  # (N1, 64)
        # image b pooled rows live at hmax1 rows [PITCH1*b, PITCH1*b+7]; boundary rows skipped

        # ---------------- stage pooled rows into the conv2 padded frame ----------
        for b in range(nb):
            r0 = ROWS2 * b + 1
            xpad2[r0:r0 + HP1, C1:C1 + WP1 * C1] = hmax1[PITCH1 * b:PITCH1 * b + HP1, :]

        # ---------------- conv2 (3x3, pad 1): 3 matmuls, kw absorbed -------------
        acc2 = None
        for kh in range(3):
            lhs = xpad2[kh:kh + M2, :].astype(bf16)                   # (M2, 80)
            t = jnp.dot(lhs, w2_ref[kh], preferred_element_type=f32)
            acc2 = t if acc2 is None else acc2 + t
        acc2 = jnp.maximum(acc2 + b2_ref[...], 0.0)
        # acc2 lanes: (w % 2)*64 + (w // 2)*C2 + c

        # ---------------- maxpool2 (2x2): W-pool in registers, then stride-2 H-pool
        y2[...] = jnp.maximum(acc2[:, :WP2 * C2], acc2[:, WP2 * C2:])        # (M2, 64)
        hmax2 = jnp.maximum(y2[pl.ds(0, N2, 2), :], y2[pl.ds(1, N2, 2), :])  # (N2, 64)
        # image b pooled rows live at hmax2 rows [PITCH2*b, PITCH2*b+3]

        # -------- flatten + fc1 + ReLU (+ dropout: identity in eval) + fc2 --------
        # PyTorch (C,H,W) flatten order is absorbed into wf1 rows; build the (nb, 256)
        # activation with register slices + lane concat, then ONE (nb,256)x(256,32) matmul.
        rows = []
        for hp in range(HP2):
            rows.append(jnp.concatenate(
                [hmax2[PITCH2 * b + hp:PITCH2 * b + hp + 1, :] for b in range(nb)],
                axis=0))                                              # (nb, 64)
        feat = jnp.concatenate(rows, axis=1)                          # (nb, 256)

        h = jnp.dot(feat.astype(bf16), wf1_ref[...], preferred_element_type=f32)
        h = jnp.maximum(h + bf1_ref[...], 0.0)
        # TODO(synk): nn.Dropout is identity in eval mode; train-mode stochastic masking not implemented.
        out = jnp.dot(h.astype(bf16), wf2_ref[...], preferred_element_type=f32) + bf2_ref[...]
        o_ref[...] = out.astype(o_ref.dtype)                          # lane-dense (nb, 128) store

    return kernel


def custom_cnn_forward(x_nchw, packed, images_per_step=None):
    (w1p, b1row, w2p, b2row, wf1p, bf1row, wf2p, bf2row) = packed
    n = x_nchw.shape[0]
    # Default: the whole batch in one grid step (best on single-TC v5e/v6e).  On v7x with
    # tiny batches, pass images_per_step=n//2 to split the "parallel" axis across both TCs.
    nb = n if images_per_step is None else int(images_per_step)
    steps = -(-n // nb)
    n_pad = steps * nb

    # NCHW -> (N, H, W*C) lane-blocked rows (single tiny layout op; everything else is fused).
    x = jnp.transpose(x_nchw, (0, 2, 3, 1)).reshape(n, H, W * C_IN)
    if n_pad != n:
        x = jnp.pad(x, ((0, n_pad - n), (0, 0), (0, 0)))

    out = pl.pallas_call(
        _make_kernel(nb),
        out_shape=jax.ShapeDtypeStruct((n_pad, OUT_LANES), jnp.float32),
        grid=(steps,),
        in_specs=[
            pl.BlockSpec((nb, H, W * C_IN), lambda i: (i, 0, 0)),
            pl.BlockSpec(w1p.shape, lambda i: (0, 0, 0)),
            pl.BlockSpec(b1row.shape, lambda i: (0, 0)),
            pl.BlockSpec(w2p.shape, lambda i: (0, 0, 0)),
            pl.BlockSpec(b2row.shape, lambda i: (0, 0)),
            pl.BlockSpec(wf1p.shape, lambda i: (0, 0)),
            pl.BlockSpec(bf1row.shape, lambda i: (0, 0)),
            pl.BlockSpec(wf2p.shape, lambda i: (0, 0)),
            pl.BlockSpec(bf2row.shape, lambda i: (0, 0)),
        ],
        out_specs=pl.BlockSpec((nb, OUT_LANES), lambda i: (i, 0)),
        scratch_shapes=[
            pltpu.VMEM((nb * ROWS1, (W + 2) * C_IN), jnp.float32),      # xpad1 (nb*18, 72)
            pltpu.VMEM((nb * ROWS1 - 2, WP1 * C1), jnp.float32),        # y1    (nb*18-2, 64)
            pltpu.VMEM((nb * ROWS2, (WP1 + 2) * C1), jnp.float32),      # xpad2 (nb*10, 80)
            pltpu.VMEM((nb * ROWS2 - 2, WP2 * C2), jnp.float32),        # y2    (nb*10-2, 64)
        ],
        compiler_params=pltpu.CompilerParams(dimension_semantics=("parallel",)),
    )(x, w1p, b1row, w2p, b2row, wf1p, bf1row, wf2p, bf2row)
    return out[:n, :NCLS]


# ----------------------------------------------------------------------------
# Parameter init (deterministic) + host-side packing into MXU/lane-dense layouts
# ----------------------------------------------------------------------------
def init_params(key):
    ks = jax.random.split(key, 8)
    p = {}
    p["w1"] = jax.random.normal(ks[0], (3, 3, C_IN, C1), jnp.float32) / jnp.sqrt(9 * C_IN)
    p["b1"] = jax.random.normal(ks[1], (C1,), jnp.float32) * 0.01
    p["w2"] = jax.random.normal(ks[2], (3, 3, C1, C2), jnp.float32) / jnp.sqrt(9 * C1)
    p["b2"] = jax.random.normal(ks[3], (C2,), jnp.float32) * 0.01
    # fc1 weight rows follow PyTorch nn.Flatten() order on NCHW: (c, h, w)
    p["wf1"] = jax.random.normal(ks[4], (FC_IN, FC_HID), jnp.float32) / jnp.sqrt(FC_IN)
    p["bf1"] = jax.random.normal(ks[5], (FC_HID,), jnp.float32) * 0.01
    p["wf2"] = jax.random.normal(ks[6], (FC_HID, NCLS), jnp.float32) / jnp.sqrt(FC_HID)
    p["bf2"] = jax.random.normal(ks[7], (NCLS,), jnp.float32) * 0.01
    return p


def _even_odd_perm(n_w, n_c):
    """Column permutation: new lane (w%2)*(n_w//2)*n_c + (w//2)*n_c + c  <-  old lane w*n_c + c."""
    perm = []
    half = (n_w // 2) * n_c
    for j in range(n_w * n_c):
        parity, rem = divmod(j, half)
        wo, c = divmod(rem, n_c)
        perm.append((2 * wo + parity) * n_c + c)
    return jnp.array(perm, dtype=jnp.int32)


def _pack_conv(w, n_w, n_cin, perm):
    """Per-kh packed weight with the kw lane shift absorbed:
    rows = padded lane (w_pad*n_cin + c_in) of the full padded row, cols = permuted output lanes."""
    c_out = w.shape[-1]
    eye = jnp.eye(n_w, dtype=jnp.float32)
    packed = []
    for kh in range(3):
        wk = jnp.zeros(((n_w + 2) * n_cin, n_w * c_out), jnp.float32)
        for kw in range(3):
            block = jnp.kron(eye, w[kh, kw])                 # (n_w*n_cin, n_w*c_out) block-diag
            wk = wk.at[kw * n_cin:kw * n_cin + n_w * n_cin, :].add(block)
        packed.append(wk[:, perm])
    return jnp.stack(packed)                                 # (3, (n_w+2)*n_cin, n_w*c_out)


def pack_params(p):
    """Pack weights once (host side): kw-absorbed banded conv taps, even/odd pool interleave,
    tiled bias rows, fc1 rows reordered to absorb the PyTorch (C,H,W) flatten, lane-padded fc2.
    MXU operands are stored in bf16; biases stay f32 (VPU post-ops run in f32)."""
    perm1 = _even_odd_perm(W1, C1)                            # 128 lanes
    perm2 = _even_odd_perm(W2, C2)                            # 128 lanes
    w1p = _pack_conv(p["w1"], W1, C_IN, perm1).astype(jnp.bfloat16)   # (3, 72, 128)
    w2p = _pack_conv(p["w2"], W2, C1, perm2).astype(jnp.bfloat16)     # (3, 80, 128)
    b1row = jnp.tile(p["b1"], W1)[None, :]                            # (1, 128), lane%C1 == c
    b2row = jnp.tile(p["b2"], W2)[None, :]                            # (1, 128), lane%C2 == c
    wf1_chw = p["wf1"].reshape(C2, HP2, WP2, FC_HID)                  # (c, h, w, f)
    wf1p = jnp.transpose(wf1_chw, (1, 2, 0, 3)).reshape(FC_IN, FC_HID).astype(jnp.bfloat16)  # (256, 32)
    bf1row = p["bf1"][None, :]                                        # (1, 32)
    wf2p = jnp.zeros((FC_HID, OUT_LANES), jnp.float32).at[:, :NCLS].set(p["wf2"]).astype(jnp.bfloat16)
    bf2row = jnp.zeros((1, OUT_LANES), jnp.float32).at[0, :NCLS].set(p["bf2"])
    return (w1p, b1row, w2p, b2row, wf1p, bf1row, wf2p, bf2row)


# ----------------------------------------------------------------------------
# Pure-JAX reference (eval-mode semantics of the PyTorch module)
# ----------------------------------------------------------------------------
def reference_forward(x_nchw, p):
    x = jnp.transpose(x_nchw, (0, 2, 3, 1))
    for w, b in ((p["w1"], p["b1"]), (p["w2"], p["b2"])):
        y = lax.conv_general_dilated(
            x, w, window_strides=(1, 1), padding=((1, 1), (1, 1)),
            dimension_numbers=("NHWC", "HWIO", "NHWC"),
            precision=lax.Precision.HIGHEST)
        y = jnp.maximum(y + b.reshape(1, 1, 1, -1), 0.0)
        n, hh, ww, cc = y.shape
        x = y.reshape(n, hh // 2, 2, ww // 2, 2, cc).max(axis=(2, 4))
    x = jnp.transpose(x, (0, 3, 1, 2)).reshape(x.shape[0], -1)   # Flatten in (C,H,W) order
    h = jnp.maximum(jnp.dot(x, p["wf1"], precision=lax.Precision.HIGHEST) + p["bf1"], 0.0)
    return jnp.dot(h, p["wf2"], precision=lax.Precision.HIGHEST) + p["bf2"]


if __name__ == "__main__":
    key = jax.random.PRNGKey(0)
    k_x, k_p = jax.random.split(key)
    x = jax.random.normal(
        k_x, (2, MasterConfig.IN_CHANNELS, MasterConfig.IMG_HEIGHT, MasterConfig.IMG_WIDTH),
        jnp.float32)
    params = init_params(k_p)
    packed = pack_params(params)

    fwd = jax.jit(custom_cnn_forward)
    out = jax.block_until_ready(fwd(x, packed))
    ref = jax.block_until_ready(reference_forward(x, params))

    assert out.shape == (2, MasterConfig.NUM_CLASSES), out.shape
    max_err = float(jnp.max(jnp.abs(out - ref)))
    # bf16 MXU operands (f32 accumulation) vs a HIGHEST-precision f32 XLA reference:
    # ~0.4% rounding per layer over 4 matmul stages => allow up to 1e-1 absolute on O(1) logits.
    if max_err > 1e-1:
        raise AssertionError(f"Pallas output mismatch vs reference, max abs err = {max_err}")

    print("KERNEL_OK")
</pallas_src>

<mosaic_0001>
module attributes {stable_mosaic.version = 11 : i64} {
  func.func @kernel(%arg0: i32, %arg1: memref<2x16x64xf32, #tpu.memory_space<vmem>>, %arg2: memref<3x72x128xbf16, #tpu.memory_space<vmem>>, %arg3: memref<1x128xf32, #tpu.memory_space<vmem>>, %arg4: memref<3x80x128xbf16, #tpu.memory_space<vmem>>, %arg5: memref<1x128xf32, #tpu.memory_space<vmem>>, %arg6: memref<256x32xbf16, #tpu.memory_space<vmem>>, %arg7: memref<1x32xf32, #tpu.memory_space<vmem>>, %arg8: memref<32x128xbf16, #tpu.memory_space<vmem>>, %arg9: memref<1x128xf32, #tpu.memory_space<vmem>>, %arg10: memref<2x128xf32, #tpu.memory_space<vmem>>, %arg11: memref<36x72xf32, #tpu.memory_space<vmem>>, %arg12: memref<34x64xf32, #tpu.memory_space<vmem>>, %arg13: memref<20x80xf32, #tpu.memory_space<vmem>>, %arg14: memref<18x64xf32, #tpu.memory_space<vmem>>) attributes {dimension_semantics = [#tpu.dimension_semantics<parallel>], iteration_bounds = array<i64: 1>, scalar_prefetch = 0 : i64, scratch_operands = 4 : i64, tpu.core_type = #tpu.core_type<tc>, window_params = [{transform_indices = @transform_0, window_bounds = array<i64: 2, 16, 64>}, {pipeline_mode = #tpu.pipeline_mode<synchronous>, transform_indices = @transform_1, window_bounds = array<i64: 3, 72, 128>}, {pipeline_mode = #tpu.pipeline_mode<synchronous>, transform_indices = @transform_2, window_bounds = array<i64: 1, 128>}, {pipeline_mode = #tpu.pipeline_mode<synchronous>, transform_indices = @transform_3, window_bounds = array<i64: 3, 80, 128>}, {pipeline_mode = #tpu.pipeline_mode<synchronous>, transform_indices = @transform_4, window_bounds = array<i64: 1, 128>}, {pipeline_mode = #tpu.pipeline_mode<synchronous>, transform_indices = @transform_5, window_bounds = array<i64: 256, 32>}, {pipeline_mode = #tpu.pipeline_mode<synchronous>, transform_indices = @transform_6, window_bounds = array<i64: 1, 32>}, {pipeline_mode = #tpu.pipeline_mode<synchronous>, transform_indices = @transform_7, window_bounds = array<i64: 32, 128>}, {pipeline_mode = #tpu.pipeline_mode<synchronous>, transform_indices = @transform_8, window_bounds = array<i64: 1, 128>}, {transform_indices = @transform_9, window_bounds = array<i64: 2, 128>}]} {
    %c0_i32 = arith.constant 0 : i32
    %0 = arith.cmpi eq, %arg0, %c0_i32 : i32
    %1 = arith.extui %0 : i1 to i32
    %c0_i32_0 = arith.constant 0 : i32
    %2 = arith.cmpi ne, %1, %c0_i32_0 : i32
    scf.if %2 {
      %cst_74 = arith.constant 0.000000e+00 : f32
      %99 = vector.broadcast %cst_74 : f32 to vector<36x72xf32>
      %c0_75 = arith.constant 0 : index
      %c0_76 = arith.constant 0 : index
      %100 = vector.load %arg11[%c0_75, %c0_76] : memref<36x72xf32, #tpu.memory_space<vmem>>, vector<36x72xf32>
      tpu.vector_store %arg11[%c0_75, %c0_76], %99 {strides = array<i32>} : memref<36x72xf32, #tpu.memory_space<vmem>>, vector<36x72xf32>,
      %cst_77 = arith.constant 0.000000e+00 : f32
      %101 = vector.broadcast %cst_77 : f32 to vector<20x80xf32>
      %c0_78 = arith.constant 0 : index
      %c0_79 = arith.constant 0 : index
      %102 = vector.load %arg13[%c0_78, %c0_79] : memref<20x80xf32, #tpu.memory_space<vmem>>, vector<20x80xf32>
      tpu.vector_store %arg13[%c0_78, %c0_79], %101 {strides = array<i32>} : memref<20x80xf32, #tpu.memory_space<vmem>>, vector<20x80xf32>,
    } else {
    }
    %c0 = arith.constant 0 : index
    %c0_1 = arith.constant 0 : index
    %c0_2 = arith.constant 0 : index
    %3 = vector.load %arg1[%c0, %c0_1, %c0_2] : memref<2x16x64xf32, #tpu.memory_space<vmem>>, vector<1x16x64xf32>
    %4 = vector.shape_cast %3 : vector<1x16x64xf32> to vector<16x64xf32>
    %c1 = arith.constant 1 : index
    %c4 = arith.constant 4 : index
    %5 = vector.load %arg11[%c1, %c4] : memref<36x72xf32, #tpu.memory_space<vmem>>, vector<16x64xf32>
    tpu.vector_store %arg11[%c1, %c4], %4 {strides = array<i32>} : memref<36x72xf32, #tpu.memory_space<vmem>>, vector<16x64xf32>,
    %c1_3 = arith.constant 1 : index
    %c0_4 = arith.constant 0 : index
    %c0_5 = arith.constant 0 : index
    %6 = vector.load %arg1[%c1_3, %c0_4, %c0_5] : memref<2x16x64xf32, #tpu.memory_space<vmem>>, vector<1x16x64xf32>
    %7 = vector.shape_cast %6 : vector<1x16x64xf32> to vector<16x64xf32>
    %c19 = arith.constant 19 : index
    %c4_6 = arith.constant 4 : index
    %8 = vector.load %arg11[%c19, %c4_6] : memref<36x72xf32, #tpu.memory_space<vmem>>, vector<16x64xf32>
    tpu.vector_store %arg11[%c19, %c4_6], %7 {strides = array<i32>} : memref<36x72xf32, #tpu.memory_space<vmem>>, vector<16x64xf32>,
    %c0_7 = arith.constant 0 : index
    %c0_8 = arith.constant 0 : index
    %9 = vector.load %arg11[%c0_7, %c0_8] : memref<36x72xf32, #tpu.memory_space<vmem>>, vector<34x72xf32>
    %10 = arith.truncf %9 : vector<34x72xf32> to vector<34x72xbf16>
    %c0_9 = arith.constant 0 : index
    %c0_10 = arith.constant 0 : index
    %c0_11 = arith.constant 0 : index
    %11 = vector.load %arg2[%c0_9, %c0_10, %c0_11] : memref<3x72x128xbf16, #tpu.memory_space<vmem>>, vector<1x72x128xbf16>
    %12 = vector.shape_cast %11 : vector<1x72x128xbf16> to vector<72x128xbf16>
    %cst = arith.constant dense<0.000000e+00> : vector<34x128xf32>
    %13 = tpu.matmul %10, %12, %cst {dimension_numbers = #tpu.dot_dimension_numbers<[1], [0], [0], [1], [0, 0, 1, 1], [], []>} : vector<34x72xbf16>, vector<72x128xbf16>, vector<34x128xf32> -> vector<34x128xf32>
    %c1_12 = arith.constant 1 : index
    %c0_13 = arith.constant 0 : index
    %14 = vector.load %arg11[%c1_12, %c0_13] : memref<36x72xf32, #tpu.memory_space<vmem>>, vector<34x72xf32>
    %15 = arith.truncf %14 : vector<34x72xf32> to vector<34x72xbf16>
    %c1_14 = arith.constant 1 : index
    %c0_15 = arith.constant 0 : index
    %c0_16 = arith.constant 0 : index
    %16 = vector.load %arg2[%c1_14, %c0_15, %c0_16] : memref<3x72x128xbf16, #tpu.memory_space<vmem>>, vector<1x72x128xbf16>
    %17 = vector.shape_cast %16 : vector<1x72x128xbf16> to vector<72x128xbf16>
    %cst_17 = arith.constant dense<0.000000e+00> : vector<34x128xf32>
    %18 = tpu.matmul %15, %17, %cst_17 {dimension_numbers = #tpu.dot_dimension_numbers<[1], [0], [0], [1], [0, 0, 1, 1], [], []>} : vector<34x72xbf16>, vector<72x128xbf16>, vector<34x128xf32> -> vector<34x128xf32>
    %19 = arith.addf %13, %18 : vector<34x128xf32>
    %c2 = arith.constant 2 : index
    %c0_18 = arith.constant 0 : index
    %20 = vector.load %arg11[%c2, %c0_18] : memref<36x72xf32, #tpu.memory_space<vmem>>, vector<34x72xf32>
    %21 = arith.truncf %20 : vector<34x72xf32> to vector<34x72xbf16>
    %c2_19 = arith.constant 2 : index
    %c0_20 = arith.constant 0 : index
    %c0_21 = arith.constant 0 : index
    %22 = vector.load %arg2[%c2_19, %c0_20, %c0_21] : memref<3x72x128xbf16, #tpu.memory_space<vmem>>, vector<1x72x128xbf16>
    %23 = vector.shape_cast %22 : vector<1x72x128xbf16> to vector<72x128xbf16>
    %cst_22 = arith.constant dense<0.000000e+00> : vector<34x128xf32>
    %24 = tpu.matmul %21, %23, %cst_22 {dimension_numbers = #tpu.dot_dimension_numbers<[1], [0], [0], [1], [0, 0, 1, 1], [], []>} : vector<34x72xbf16>, vector<72x128xbf16>, vector<34x128xf32> -> vector<34x128xf32>
    %25 = arith.addf %19, %24 : vector<34x128xf32>
    %c0_23 = arith.constant 0 : index
    %c0_24 = arith.constant 0 : index
    %26 = vector.load %arg3[%c0_23, %c0_24] : memref<1x128xf32, #tpu.memory_space<vmem>>, vector<1x128xf32>
    %27 = vector.broadcast %26 : vector<1x128xf32> to vector<34x128xf32>
    %28 = arith.addf %25, %27 : vector<34x128xf32>
    %cst_25 = arith.constant 0.000000e+00 : f32
    %29 = vector.broadcast %cst_25 : f32 to vector<34x128xf32>
    %30 = arith.maximumf %28, %29 : vector<34x128xf32>
    %31 = vector.extract_strided_slice %30 {offsets = [0, 0], sizes = [34, 64], strides = [1, 1]} : vector<34x128xf32> to vector<34x64xf32>
    %32 = vector.extract_strided_slice %30 {offsets = [0, 64], sizes = [34, 64], strides = [1, 1]} : vector<34x128xf32> to vector<34x64xf32>
    %33 = arith.maximumf %31, %32 : vector<34x64xf32>
    %c0_26 = arith.constant 0 : index
    %c0_27 = arith.constant 0 : index
    %34 = vector.load %arg12[%c0_26, %c0_27] : memref<34x64xf32, #tpu.memory_space<vmem>>, vector<34x64xf32>
    tpu.vector_store %arg12[%c0_26, %c0_27], %33 {strides = array<i32>} : memref<34x64xf32, #tpu.memory_space<vmem>>, vector<34x64xf32>,
    %c0_28 = arith.constant 0 : index
    %c0_29 = arith.constant 0 : index
    %35 = tpu.strided_load %arg12[%c0_28, %c0_29] {strides = array<i32: 2, 1>} : memref<34x64xf32, #tpu.memory_space<vmem>>, vector<17x64xf32>
    %c1_30 = arith.constant 1 : index
    %c0_31 = arith.constant 0 : index
    %36 = tpu.strided_load %arg12[%c1_30, %c0_31] {strides = array<i32: 2, 1>} : memref<34x64xf32, #tpu.memory_space<vmem>>, vector<17x64xf32>
    %37 = arith.maximumf %35, %36 : vector<17x64xf32>
    %38 = vector.extract_strided_slice %37 {offsets = [0, 0], sizes = [8, 64], strides = [1, 1]} : vector<17x64xf32> to vector<8x64xf32>
    %c1_32 = arith.constant 1 : index
    %c8 = arith.constant 8 : index
    %39 = vector.load %arg13[%c1_32, %c8] : memref<20x80xf32, #tpu.memory_space<vmem>>, vector<8x64xf32>
    tpu.vector_store %arg13[%c1_32, %c8], %38 {strides = array<i32>} : memref<20x80xf32, #tpu.memory_space<vmem>>, vector<8x64xf32>,
    %40 = vector.extract_strided_slice %37 {offsets = [9, 0], sizes = [8, 64], strides = [1, 1]} : vector<17x64xf32> to vector<8x64xf32>
    %c11 = arith.constant 11 : index
    %c8_33 = arith.constant 8 : index
    %41 = vector.load %arg13[%c11, %c8_33] : memref<20x80xf32, #tpu.memory_space<vmem>>, vector<8x64xf32>
    tpu.vector_store %arg13[%c11, %c8_33], %40 {strides = array<i32>} : memref<20x80xf32, #tpu.memory_space<vmem>>, vector<8x64xf32>,
    %c0_34 = arith.constant 0 : index
    %c0_35 = arith.constant 0 : index
    %42 = vector.load %arg13[%c0_34, %c0_35] : memref<20x80xf32, #tpu.memory_space<vmem>>, vector<18x80xf32>
    %43 = arith.truncf %42 : vector<18x80xf32> to vector<18x80xbf16>
    %c0_36 = arith.constant 0 : index
    %c0_37 = arith.constant 0 : index
    %c0_38 = arith.constant 0 : index
    %44 = vector.load %arg4[%c0_36, %c0_37, %c0_38] : memref<3x80x128xbf16, #tpu.memory_space<vmem>>, vector<1x80x128xbf16>
    %45 = vector.shape_cast %44 : vector<1x80x128xbf16> to vector<80x128xbf16>
    %cst_39 = arith.constant dense<0.000000e+00> : vector<18x128xf32>
    %46 = tpu.matmul %43, %45, %cst_39 {dimension_numbers = #tpu.dot_dimension_numbers<[1], [0], [0], [1], [0, 0, 1, 1], [], []>} : vector<18x80xbf16>, vector<80x128xbf16>, vector<18x128xf32> -> vector<18x128xf32>
    %c1_40 = arith.constant 1 : index
    %c0_41 = arith.constant 0 : index
    %47 = vector.load %arg13[%c1_40, %c0_41] : memref<20x80xf32, #tpu.memory_space<vmem>>, vector<18x80xf32>
    %48 = arith.truncf %47 : vector<18x80xf32> to vector<18x80xbf16>
    %c1_42 = arith.constant 1 : index
    %c0_43 = arith.constant 0 : index
    %c0_44 = arith.constant 0 : index
    %49 = vector.load %arg4[%c1_42, %c0_43, %c0_44] : memref<3x80x128xbf16, #tpu.memory_space<vmem>>, vector<1x80x128xbf16>
    %50 = vector.shape_cast %49 : vector<1x80x128xbf16> to vector<80x128xbf16>
    %cst_45 = arith.constant dense<0.000000e+00> : vector<18x128xf32>
    %51 = tpu.matmul %48, %50, %cst_45 {dimension_numbers = #tpu.dot_dimension_numbers<[1], [0], [0], [1], [0, 0, 1, 1], [], []>} : vector<18x80xbf16>, vector<80x128xbf16>, vector<18x128xf32> -> vector<18x128xf32>
    %52 = arith.addf %46, %51 : vector<18x128xf32>
    %c2_46 = arith.constant 2 : index
    %c0_47 = arith.constant 0 : index
    %53 = vector.load %arg13[%c2_46, %c0_47] : memref<20x80xf32, #tpu.memory_space<vmem>>, vector<18x80xf32>
    %54 = arith.truncf %53 : vector<18x80xf32> to vector<18x80xbf16>
    %c2_48 = arith.constant 2 : index
    %c0_49 = arith.constant 0 : index
    %c0_50 = arith.constant 0 : index
    %55 = vector.load %arg4[%c2_48, %c0_49, %c0_50] : memref<3x80x128xbf16, #tpu.memory_space<vmem>>, vector<1x80x128xbf16>
    %56 = vector.shape_cast %55 : vector<1x80x128xbf16> to vector<80x128xbf16>
    %cst_51 = arith.constant dense<0.000000e+00> : vector<18x128xf32>
    %57 = tpu.matmul %54, %56, %cst_51 {dimension_numbers = #tpu.dot_dimension_numbers<[1], [0], [0], [1], [0, 0, 1, 1], [], []>} : vector<18x80xbf16>, vector<80x128xbf16>, vector<18x128xf32> -> vector<18x128xf32>
    %58 = arith.addf %52, %57 : vector<18x128xf32>
    %c0_52 = arith.constant 0 : index
    %c0_53 = arith.constant 0 : index
    %59 = vector.load %arg5[%c0_52, %c0_53] : memref<1x128xf32, #tpu.memory_space<vmem>>, vector<1x128xf32>
    %60 = vector.broadcast %59 : vector<1x128xf32> to vector<18x128xf32>
    %61 = arith.addf %58, %60 : vector<18x128xf32>
    %cst_54 = arith.constant 0.000000e+00 : f32
    %62 = vector.broadcast %cst_54 : f32 to vector<18x128xf32>
    %63 = arith.maximumf %61, %62 : vector<18x128xf32>
    %64 = vector.extract_strided_slice %63 {offsets = [0, 0], sizes = [18, 64], strides = [1, 1]} : vector<18x128xf32> to vector<18x64xf32>
    %65 = vector.extract_strided_slice %63 {offsets = [0, 64], sizes = [18, 64], strides = [1, 1]} : vector<18x128xf32> to vector<18x64xf32>
    %66 = arith.maximumf %64, %65 : vector<18x64xf32>
    %c0_55 = arith.constant 0 : index
    %c0_56 = arith.constant 0 : index
    %67 = vector.load %arg14[%c0_55, %c0_56] : memref<18x64xf32, #tpu.memory_space<vmem>>, vector<18x64xf32>
    tpu.vector_store %arg14[%c0_55, %c0_56], %66 {strides = array<i32>} : memref<18x64xf32, #tpu.memory_space<vmem>>, vector<18x64xf32>,
    %c0_57 = arith.constant 0 : index
    %c0_58 = arith.constant 0 : index
    %68 = tpu.strided_load %arg14[%c0_57, %c0_58] {strides = array<i32: 2, 1>} : memref<18x64xf32, #tpu.memory_space<vmem>>, vector<9x64xf32>
    %c1_59 = arith.constant 1 : index
    %c0_60 = arith.constant 0 : index
    %69 = tpu.strided_load %arg14[%c1_59, %c0_60] {strides = array<i32: 2, 1>} : memref<18x64xf32, #tpu.memory_space<vmem>>, vector<9x64xf32>
    %70 = arith.maximumf %68, %69 : vector<9x64xf32>
    %71 = vector.extract_strided_slice %70 {offsets = [0, 0], sizes = [1, 64], strides = [1, 1]} : vector<9x64xf32> to vector<1x64xf32>
    %72 = vector.extract_strided_slice %70 {offsets = [5, 0], sizes = [1, 64], strides = [1, 1]} : vector<9x64xf32> to vector<1x64xf32>
    %73 = tpu.concatenate %71, %72 in 0 : vector<1x64xf32>, vector<1x64xf32> -> vector<2x64xf32>
    %74 = vector.extract_strided_slice %70 {offsets = [1, 0], sizes = [1, 64], strides = [1, 1]} : vector<9x64xf32> to vector<1x64xf32>
    %75 = vector.extract_strided_slice %70 {offsets = [6, 0], sizes = [1, 64], strides = [1, 1]} : vector<9x64xf32> to vector<1x64xf32>
    %76 = tpu.concatenate %74, %75 in 0 : vector<1x64xf32>, vector<1x64xf32> -> vector<2x64xf32>
    %77 = vector.extract_strided_slice %70 {offsets = [2, 0], sizes = [1, 64], strides = [1, 1]} : vector<9x64xf32> to vector<1x64xf32>
    %78 = vector.extract_strided_slice %70 {offsets = [7, 0], sizes = [1, 64], strides = [1, 1]} : vector<9x64xf32> to vector<1x64xf32>
    %79 = tpu.concatenate %77, %78 in 0 : vector<1x64xf32>, vector<1x64xf32> -> vector<2x64xf32>
    %80 = vector.extract_strided_slice %70 {offsets = [3, 0], sizes = [1, 64], strides = [1, 1]} : vector<9x64xf32> to vector<1x64xf32>
    %81 = vector.extract_strided_slice %70 {offsets = [8, 0], sizes = [1, 64], strides = [1, 1]} : vector<9x64xf32> to vector<1x64xf32>
    %82 = tpu.concatenate %80, %81 in 0 : vector<1x64xf32>, vector<1x64xf32> -> vector<2x64xf32>
    %83 = tpu.concatenate %73, %76, %79, %82 in 1 : vector<2x64xf32>, vector<2x64xf32>, vector<2x64xf32>, vector<2x64xf32> -> vector<2x256xf32>
    %84 = arith.truncf %83 : vector<2x256xf32> to vector<2x256xbf16>
    %c0_61 = arith.constant 0 : index
    %c0_62 = arith.constant 0 : index
    %85 = vector.load %arg6[%c0_61, %c0_62] : memref<256x32xbf16, #tpu.memory_space<vmem>>, vector<256x32xbf16>
    %cst_63 = arith.constant dense<0.000000e+00> : vector<2x32xf32>
    %86 = tpu.matmul %84, %85, %cst_63 {dimension_numbers = #tpu.dot_dimension_numbers<[1], [0], [0], [1], [0, 0, 1, 1], [], []>} : vector<2x256xbf16>, vector<256x32xbf16>, vector<2x32xf32> -> vector<2x32xf32>
    %c0_64 = arith.constant 0 : index
    %c0_65 = arith.constant 0 : index
    %87 = vector.load %arg7[%c0_64, %c0_65] : memref<1x32xf32, #tpu.memory_space<vmem>>, vector<1x32xf32>
    %88 = vector.broadcast %87 : vector<1x32xf32> to vector<2x32xf32>
    %89 = arith.addf %86, %88 : vector<2x32xf32>
    %cst_66 = arith.constant 0.000000e+00 : f32
    %90 = vector.broadcast %cst_66 : f32 to vector<2x32xf32>
    %91 = arith.maximumf %89, %90 : vector<2x32xf32>
    %92 = arith.truncf %91 : vector<2x32xf32> to vector<2x32xbf16>
    %c0_67 = arith.constant 0 : index
    %c0_68 = arith.constant 0 : index
    %93 = vector.load %arg8[%c0_67, %c0_68] : memref<32x128xbf16, #tpu.memory_space<vmem>>, vector<32x128xbf16>
    %cst_69 = arith.constant dense<0.000000e+00> : vector<2x128xf32>
    %94 = tpu.matmul %92, %93, %cst_69 {dimension_numbers = #tpu.dot_dimension_numbers<[1], [0], [0], [1], [0, 0, 1, 1], [], []>} : vector<2x32xbf16>, vector<32x128xbf16>, vector<2x128xf32> -> vector<2x128xf32>
    %c0_70 = arith.constant 0 : index
    %c0_71 = arith.constant 0 : index
    %95 = vector.load %arg9[%c0_70, %c0_71] : memref<1x128xf32, #tpu.memory_space<vmem>>, vector<1x128xf32>
    %96 = vector.broadcast %95 : vector<1x128xf32> to vector<2x128xf32>
    %97 = arith.addf %94, %96 : vector<2x128xf32>
    %c0_72 = arith.constant 0 : index
    %c0_73 = arith.constant 0 : index
    %98 = vector.load %arg10[%c0_72, %c0_73] : memref<2x128xf32, #tpu.memory_space<vmem>>, vector<2x128xf32>
    tpu.vector_store %arg10[%c0_72, %c0_73], %97 {strides = array<i32>} : memref<2x128xf32, #tpu.memory_space<vmem>>, vector<2x128xf32>,
    return
  }
  func.func @transform_0(%arg0: i32) -> (i32, i32, i32) {
    %c0_i32 = arith.constant 0 : i32
    %c0_i32_0 = arith.constant 0 : i32
    %c0_i32_1 = arith.constant 0 : i32
    return %arg0, %c0_i32, %c0_i32_0 : i32, i32, i32
  }
  func.func @transform_1(%arg0: i32) -> (i32, i32, i32) {
    %c0_i32 = arith.constant 0 : i32
    %c0_i32_0 = arith.constant 0 : i32
    %c0_i32_1 = arith.constant 0 : i32
    %c0_i32_2 = arith.constant 0 : i32
    return %c0_i32, %c0_i32_0, %c0_i32_1 : i32, i32, i32
  }
  func.func @transform_2(%arg0: i32) -> (i32, i32) {
    %c0_i32 = arith.constant 0 : i32
    %c0_i32_0 = arith.constant 0 : i32
    %c0_i32_1 = arith.constant 0 : i32
    return %c0_i32, %c0_i32_0 : i32, i32
  }
  func.func @transform_3(%arg0: i32) -> (i32, i32, i32) {
    %c0_i32 = arith.constant 0 : i32
    %c0_i32_0 = arith.constant 0 : i32
    %c0_i32_1 = arith.constant 0 : i32
    %c0_i32_2 = arith.constant 0 : i32
    return %c0_i32, %c0_i32_0, %c0_i32_1 : i32, i32, i32
  }
  func.func @transform_4(%arg0: i32) -> (i32, i32) {
    %c0_i32 = arith.constant 0 : i32
    %c0_i32_0 = arith.constant 0 : i32
    %c0_i32_1 = arith.constant 0 : i32
    return %c0_i32, %c0_i32_0 : i32, i32
  }
  func.func @transform_5(%arg0: i32) -> (i32, i32) {
    %c0_i32 = arith.constant 0 : i32
    %c0_i32_0 = arith.constant 0 : i32
    %c0_i32_1 = arith.constant 0 : i32
    return %c0_i32, %c0_i32_0 : i32, i32
  }
  func.func @transform_6(%arg0: i32) -> (i32, i32) {
    %c0_i32 = arith.constant 0 : i32
    %c0_i32_0 = arith.constant 0 : i32
    %c0_i32_1 = arith.constant 0 : i32
    return %c0_i32, %c0_i32_0 : i32, i32
  }
  func.func @transform_7(%arg0: i32) -> (i32, i32) {
    %c0_i32 = arith.constant 0 : i32
    %c0_i32_0 = arith.constant 0 : i32
    %c0_i32_1 = arith.constant 0 : i32
    return %c0_i32, %c0_i32_0 : i32, i32
  }
  func.func @transform_8(%arg0: i32) -> (i32, i32) {
    %c0_i32 = arith.constant 0 : i32
    %c0_i32_0 = arith.constant 0 : i32
    %c0_i32_1 = arith.constant 0 : i32
    return %c0_i32, %c0_i32_0 : i32, i32
  }
  func.func @transform_9(%arg0: i32) -> (i32, i32) {
    %c0_i32 = arith.constant 0 : i32
    %c0_i32_0 = arith.constant 0 : i32
    return %arg0, %c0_i32 : i32, i32
  }
}

</mosaic_0001>

<llo_original>
// kernel: custom_cnn_forward.1
$region0: #{custom_cnn_forward.1}
  #allocation0 [shape = 'u32[]', space=smem, size = 0x4, offset = 0x4, fixed_abs, tag = 'smem constant byte address 0x4 - core index']
  #allocation1 [shape = 'u32[72,128]{1,0:T(1,128)}', space=vmem, size = 0x9000, scoped, tag = 'internal scratch']
  #allocation2 [shape = 'f32[36,72]{1,0:T(8,128)}', space=vmem, size = 0x5000, scoped, tag = 'scratch operand']
  #allocation3 [shape = 'f32[34,64]{1,0:T(8,128)}', space=vmem, size = 0x5000, scoped, tag = 'scratch operand']
  #allocation4 [shape = 'f32[20,80]{1,0:T(8,128)}', space=vmem, size = 0x3000, scoped, tag = 'scratch operand']
  #allocation5 [shape = 'f32[18,64]{1,0:T(8,128)}', space=vmem, size = 0x3000, scoped, tag = 'scratch operand']
  %s0 = inlined_call_operand.vmem [shape: f32[2,16,64], index: 0, kind: input, shape index: {}]
  %s1 = inlined_call_operand.vmem [shape: bf16[3,72,128], index: 1, kind: input, shape index: {}]
  %s2 = inlined_call_operand.vmem [shape: f32[1,128], index: 2, kind: input, shape index: {}]
  %s3 = inlined_call_operand.vmem [shape: bf16[3,80,128], index: 3, kind: input, shape index: {}]
  %s4 = inlined_call_operand.vmem [shape: f32[1,128], index: 4, kind: input, shape index: {}]
  %s5 = inlined_call_operand.vmem [shape: bf16[256,32], index: 5, kind: input, shape index: {}]
  %s6 = inlined_call_operand.vmem [shape: f32[1,32], index: 6, kind: input, shape index: {}]
  %s7 = inlined_call_operand.vmem [shape: bf16[32,128], index: 7, kind: input, shape index: {}]
  %s8 = inlined_call_operand.vmem [shape: f32[1,128], index: 8, kind: input, shape index: {}]
  %s9 = inlined_call_operand.hbm [shape: f32[2,128], index: 9, kind: output, shape index: {}]
  %s10 = sld [smem:[#allocation0]]
  $region50: #{custom_cnn_forward.1} parent=0
    _
  %s12 = ssub.s32 1, %s10
  %s13 = scalar_select 0, %s12, %s10
  $region1: #{custom_cnn_forward.1} parent=0
    #allocation6 [shape = 'u8[1024]{0}', space=vmem, size = 0x400, scoped, tag = 'output window, operand 0, single buffered']
    #allocation7 [shape = 's32[1]{0}', space=sflag, size = 0x4, scoped, tag = 'scoped memory for custom_cnn_forward.1']
    %14 = vsyncpa [#allocation7], 0
    // Predicated region
    $region2: #{custom_cnn_forward.1} parent=1 // pred_check
      _
    $region3: #{custom_cnn_forward.1} parent=1 // pred_check_branch
      %16 = sbr.rel (0) target = $region5
    $region4: #{custom_cnn_forward.1} parent=1 // pred_region
      _
    $region5: #{custom_cnn_forward.1} parent=1 // pred_fallthru
      _
    // Predicated region
    $region6: #{custom_cnn_forward.1} parent=1 // pred_check
      _
    $region7: #{custom_cnn_forward.1} parent=1 // pred_check_branch
      %18 = sbr.rel (0) target = $region9
    $region8: #{custom_cnn_forward.1} parent=1 // pred_region
      _
    $region9: #{custom_cnn_forward.1} parent=1 // pred_fallthru
      _
    // Predicated region
    $region10: #{custom_cnn_forward.1} parent=1 // pred_check
      _
    $region11: #{custom_cnn_forward.1} parent=1 // pred_check_branch
      %20 = sbr.rel (0) target = $region13
    $region12: #{custom_cnn_forward.1} parent=1 // pred_region
      _
    $region13: #{custom_cnn_forward.1} parent=1 // pred_fallthru
      _
    // Predicated region
    $region14: #{custom_cnn_forward.1} parent=1 // pred_check
      _
    $region15: #{custom_cnn_forward.1} parent=1 // pred_check_branch
      %22 = sbr.rel (0) target = $region17
    $region16: #{custom_cnn_forward.1} parent=1 // pred_region
      _
    $region17: #{custom_cnn_forward.1} parent=1 // pred_fallthru
      _
    // Predicated region
    $region18: #{custom_cnn_forward.1} parent=1 // pred_check
      _
    $region19: #{custom_cnn_forward.1} parent=1 // pred_check_branch
      %24 = sbr.rel (0) target = $region21
    $region20: #{custom_cnn_forward.1} parent=1 // pred_region
      _
    $region21: #{custom_cnn_forward.1} parent=1 // pred_fallthru
      _
    // Predicated region
    $region22: #{custom_cnn_forward.1} parent=1 // pred_check
      _
    $region23: #{custom_cnn_forward.1} parent=1 // pred_check_branch
      %26 = sbr.rel (0) target = $region25
    $region24: #{custom_cnn_forward.1} parent=1 // pred_region
      _
    $region25: #{custom_cnn_forward.1} parent=1 // pred_fallthru
      _
    // Predicated region
    $region26: #{custom_cnn_forward.1} parent=1 // pred_check
      _
    $region27: #{custom_cnn_forward.1} parent=1 // pred_check_branch
      %28 = sbr.rel (0) target = $region29
    $region28: #{custom_cnn_forward.1} parent=1 // pred_region
      _
    $region29: #{custom_cnn_forward.1} parent=1 // pred_fallthru
      _
    // Predicated region
    $region30: #{custom_cnn_forward.1} parent=1 // pred_check
      _
    $region31: #{custom_cnn_forward.1} parent=1 // pred_check_branch
      %30 = sbr.rel (0) target = $region33
    $region32: #{custom_cnn_forward.1} parent=1 // pred_region
      _
    $region33: #{custom_cnn_forward.1} parent=1 // pred_fallthru
      _
    // Predicated region
    $region34: #{custom_cnn_forward.1} parent=1 // pred_check
      _
    $region35: #{custom_cnn_forward.1} parent=1 // pred_check_branch
      %32 = sbr.rel (0) target = $region37
    $region36: #{custom_cnn_forward.1} parent=1 // pred_region
      _
    $region37: #{custom_cnn_forward.1} parent=1 // pred_fallthru
      _
    %p34 = scmp.eq.s32.totalorder 0, 0
    // Predicated region
    $region38: #{custom_cnn_forward.1} parent=1 // pred_check
      %p35 = pneg %p34
    $region39: #{custom_cnn_forward.1} parent=1 // pred_check_branch
      %37 = sbr.rel (%p35) target = $region41
    $region40: #{custom_cnn_forward.1} parent=1 // pred_region
      %vm38 = vcmask 588800
      %39 = vst.msk [vmem:[#allocation2] sm:$0xff] %vm38, 0.0
      %40 = vst.msk [vmem:[#allocation2 + $0x8] sm:$0xff] %vm38, 0.0
      %41 = vst.msk [vmem:[#allocation2 + $0x10] sm:$0xff] %vm38, 0.0
      %42 = vst.msk [vmem:[#allocation2 + $0x18] sm:$0xff] %vm38, 0.0
      %vm43 = vcmask 584704
      %44 = vst.msk [vmem:[#allocation2 + $0x20] sm:$0xf] %vm43, 0.0
      %vm45 = vcmask 654336
      %46 = vst.msk [vmem:[#allocation4] sm:$0xff] %vm45, 0.0
      %47 = vst.msk [vmem:[#allocation4 + $0x8] sm:$0xff] %vm45, 0.0
      %vm48 = vcmask 650240
      %49 = vst.msk [vmem:[#allocation4 + $0x10] sm:$0xf] %vm48, 0.0
    $region41: #{custom_cnn_forward.1} parent=1 // pred_fallthru
      _
    %v50 = vld [vmem:[%s0] sm:$0xff]
    %v51 = vld [vmem:[%s0 + $0x8] sm:$0xff]
    %54 = vrot.lane.b32.xlu0 %v50, 4
    %v55 = vpop.permute.xlu0 %54
    %56 = vrot.lane.b32.xlu0 %v51, 4
    %v57 = vpop.permute.xlu0 %56
    %vm60 = vcmask 556064
    %61 = vst.msk [vmem:[#allocation2 + $0x1] sm:$0xff] %vm60, %v55
    %62 = vst.msk [vmem:[#allocation2 + $0x9] sm:$0xff] %vm60, %v57
    %s63 = scalar_lea.vmem %s0, 16
    %v64 = vld [vmem:[%s63] sm:$0xff]
    %v65 = vld [vmem:[%s63 + $0x8] sm:$0xff]
    %68 = vrot.lane.b32.xlu0 %v64, 4
    %v69 = vpop.permute.xlu0 %68
    %70 = vrot.lane.b32.xlu0 %v65, 4
    %v71 = vpop.permute.xlu0 %70
    %74 = vst.msk [vmem:[#allocation2 + $0x13] sm:$0xff] %vm60, %v69
    %75 = vst.msk [vmem:[#allocation2 + $0x1b] sm:$0xff] %vm60, %v71
    %v76 = vld [vmem:[#allocation2] sm:$0xff]
    %v77 = vld [vmem:[#allocation2 + $0x8] sm:$0xff]
    %v78 = vld [vmem:[#allocation2 + $0x10] sm:$0xff]
    %v79 = vld [vmem:[#allocation2 + $0x18] sm:$0xff]
    %v80 = vld [vmem:[#allocation2 + $0x20] sm:$0x3]
    %v81 = vpack.c.bf16 %v77, %v76
    %v82 = vpack.c.bf16 %v79, %v78
    %v83 = vpack.c.bf16 %v80, %v80
    %v84 = vld [vmem:[%s1] sm:$0xf]
    %v85 = vld [vmem:[%s1 + $0x4] sm:$0xf]
    %v86 = vld [vmem:[%s1 + $0x8] sm:$0xf]
    %v87 = vld [vmem:[%s1 + $0xc] sm:$0xf]
    %v88 = vld [vmem:[%s1 + $0x10] sm:$0xf]
    %v89 = vld [vmem:[%s1 + $0x14] sm:$0xf]
    %v90 = vld [vmem:[%s1 + $0x18] sm:$0xf]
    %v91 = vld [vmem:[%s1 + $0x1c] sm:$0xf]
    %v92 = vld [vmem:[%s1 + $0x20] sm:$0xf]
    %v93 = vld [vmem:[#allocation2 + $0x1] sm:$0xff]
    %v94 = vld [vmem:[#allocation2 + $0x9] sm:$0xff]
    %v95 = vld [vmem:[#allocation2 + $0x11] sm:$0xff]
    %v96 = vld [vmem:[#allocation2 + $0x19] sm:$0xff]
    %v97 = vld [vmem:[#allocation2 + $0x21] sm:$0x3]
    %v98 = vpack.c.bf16 %v94, %v93
    %v99 = vpack.c.bf16 %v96, %v95
    %v100 = vpack.c.bf16 %v97, %v97
    %s101 = scalar_lea.vmem %s1, 36
    %v102 = vld [vmem:[%s101] sm:$0xf]
    %v103 = vld [vmem:[%s101 + $0x4] sm:$0xf]
    %v104 = vld [vmem:[%s101 + $0x8] sm:$0xf]
    %v105 = vld [vmem:[%s101 + $0xc] sm:$0xf]
    %v106 = vld [vmem:[%s101 + $0x10] sm:$0xf]
    %v107 = vld [vmem:[%s101 + $0x14] sm:$0xf]
    %v108 = vld [vmem:[%s101 + $0x18] sm:$0xf]
    %v109 = vld [vmem:[%s101 + $0x1c] sm:$0xf]
    %v110 = vld [vmem:[%s101 + $0x20] sm:$0xf]
    %v120 = vunpack.c.l.b16 %v102
    %v121 = vunpack.c.l.b16 %v103
    %v122 = vunpack.c.l.b16 %v104
    %v123 = vunpack.c.l.b16 %v105
    %v124 = vunpack.c.l.b16 %v106
    %v125 = vunpack.c.l.b16 %v107
    %v126 = vunpack.c.l.b16 %v108
    %v127 = vunpack.c.l.b16 %v109
    %v128 = vunpack.c.l.b16 %v110
    %v129 = vpack.c.b16 %v121, %v120
    %v130 = vpack.c.b16 %v123, %v122
    %v131 = vpack.c.b16 %v125, %v124
    %v132 = vpack.c.b16 %v127, %v126
    %v133 = vpack.c.b16 %v128, %v128
    %vm138 = vcmask 588800
    %v140 = vsel %vm138, %v98, 0
    %v143 = vsel %vm138, %v99, 0
    %v146 = vsel %vm138, %v100, 0
    %vm148 = vcmask 1043456
    %v150 = vsel %vm148, %v133, 0
    %152 = vmatpush.bf16.msra.mxu0 0
    %153 = vmatpush.bf16.msra.mxu0 0
    %154 = vmatpush.bf16.msra.mxu0 0
    %155 = vmatpush.bf16.msra.mxu0 %v150
    %156 = vmatpush.bf16.msra.mxu0 %v132
    %157 = vmatpush.bf16.msra.mxu0 %v131
    %158 = vmatpush.bf16.msra.mxu0 %v130
    %159 = vmatpush.bf16.msra.mxu0 %v129
    %160 = vmatmul.bf16.gmra.mxu0 %v140
    %v161 = vpop.f32.mrf.mxu0
    %v162 = vadd.f32 0.0, %v161
    %v163 = vpop.f32.mrf.mxu0
    %v164 = vadd.f32 0.0, %v163
    %165 = vmatmul.bf16.gmra.mxu0 %v143
    %v166 = vpop.f32.mrf.mxu0
    %v167 = vadd.f32 0.0, %v166
    %v168 = vpop.f32.mrf.mxu0
    %v169 = vadd.f32 0.0, %v168
    %170 = vmatmul.bf16.gmra.mxu0 %v146
    %v171 = vpop.f32.mrf.mxu0
    %v172 = vadd.f32 0.0, %v171
    %v173 = vpop.f32.mrf.mxu0
    %174 = vdwg.mxu0
    %v184 = vunpack.c.l.b16 %v84
    %v185 = vunpack.c.l.b16 %v85
    %v186 = vunpack.c.l.b16 %v86
    %v187 = vunpack.c.l.b16 %v87
    %v188 = vunpack.c.l.b16 %v88
    %v189 = vunpack.c.l.b16 %v89
    %v190 = vunpack.c.l.b16 %v90
    %v191 = vunpack.c.l.b16 %v91
    %v192 = vunpack.c.l.b16 %v92
    %v193 = vpack.c.b16 %v185, %v184
    %v194 = vpack.c.b16 %v187, %v186
    %v195 = vpack.c.b16 %v189, %v188
    %v196 = vpack.c.b16 %v191, %v190
    %v197 = vpack.c.b16 %v192, %v192
    %v203 = vsel %vm138, %v81, 0
    %v206 = vsel %vm138, %v82, 0
    %v209 = vsel %vm138, %v83, 0
    %v212 = vsel %vm148, %v197, 0
    %214 = vmatpush.bf16.msra.mxu0 0
    %215 = vmatpush.bf16.msra.mxu0 0
    %216 = vmatpush.bf16.msra.mxu0 0
    %217 = vmatpush.bf16.msra.mxu0 %v212
    %218 = vmatpush.bf16.msra.mxu0 %v196
    %219 = vmatpush.bf16.msra.mxu0 %v195
    %220 = vmatpush.bf16.msra.mxu0 %v194
    %221 = vmatpush.bf16.msra.mxu0 %v193
    %222 = vmatmul.bf16.gmra.mxu0 %v203
    %v223 = vpop.f32.mrf.mxu0
    %v224 = vadd.f32 %v162, %v223
    %v225 = vpop.f32.mrf.mxu0
    %v226 = vadd.f32 %v164, %v225
    %227 = vmatmul.bf16.gmra.mxu0 %v206
    %v228 = vpop.f32.mrf.mxu0
    %v229 = vadd.f32 %v167, %v228
    %v230 = vpop.f32.mrf.mxu0
    %v231 = vadd.f32 %v169, %v230
    %232 = vmatmul.bf16.gmra.mxu0 %v209
    %v233 = vpop.f32.mrf.mxu0
    %v234 = vadd.f32 %v172, %v233
    %v235 = vpop.f32.mrf.mxu0
    %236 = vdwg.mxu0
    %v237 = vld [vmem:[#allocation2 + $0x2] sm:$0xff]
    %v238 = vld [vmem:[#allocation2 + $0xa] sm:$0xff]
    %v239 = vld [vmem:[#allocation2 + $0x12] sm:$0xff]
    %v240 = vld [vmem:[#allocation2 + $0x1a] sm:$0xff]
    %v241 = vld [vmem:[#allocation2 + $0x22] sm:$0x3]
    %v242 = vpack.c.bf16 %v238, %v237
    %v243 = vpack.c.bf16 %v240, %v239
    %v244 = vpack.c.bf16 %v241, %v241
    %s245 = scalar_lea.vmem %s1, 72
    %v246 = vld [vmem:[%s245] sm:$0xf]
    %v247 = vld [vmem:[%s245 + $0x4] sm:$0xf]
    %v248 = vld [vmem:[%s245 + $0x8] sm:$0xf]
    %v249 = vld [vmem:[%s245 + $0xc] sm:$0xf]
    %v250 = vld [vmem:[%s245 + $0x10] sm:$0xf]
    %v251 = vld [vmem:[%s245 + $0x14] sm:$0xf]
    %v252 = vld [vmem:[%s245 + $0x18] sm:$0xf]
    %v253 = vld [vmem:[%s245 + $0x1c] sm:$0xf]
    %v254 = vld [vmem:[%s245 + $0x20] sm:$0xf]
    %v264 = vunpack.c.l.b16 %v246
    %v265 = vunpack.c.l.b16 %v247
    %v266 = vunpack.c.l.b16 %v248
    %v267 = vunpack.c.l.b16 %v249
    %v268 = vunpack.c.l.b16 %v250
    %v269 = vunpack.c.l.b16 %v251
    %v270 = vunpack.c.l.b16 %v252
    %v271 = vunpack.c.l.b16 %v253
    %v272 = vunpack.c.l.b16 %v254
    %v273 = vpack.c.b16 %v265, %v264
    %v274 = vpack.c.b16 %v267, %v266
    %v275 = vpack.c.b16 %v269, %v268
    %v276 = vpack.c.b16 %v271, %v270
    %v277 = vpack.c.b16 %v272, %v272
    %v283 = vsel %vm138, %v242, 0
    %v286 = vsel %vm138, %v243, 0
    %v289 = vsel %vm138, %v244, 0
    %v292 = vsel %vm148, %v277, 0
    %294 = vmatpush.bf16.msra.mxu0 0
    %295 = vmatpush.bf16.msra.mxu0 0
    %296 = vmatpush.bf16.msra.mxu0 0
    %297 = vmatpush.bf16.msra.mxu0 %v292
    %298 = vmatpush.bf16.msra.mxu0 %v276
    %299 = vmatpush.bf16.msra.mxu0 %v275
    %300 = vmatpush.bf16.msra.mxu0 %v274
    %301 = vmatpush.bf16.msra.mxu0 %v273
    %302 = vmatmul.bf16.gmra.mxu0 %v283
    %v303 = vpop.f32.mrf.mxu0
    %v304 = vadd.f32 0.0, %v303
    %v305 = vpop.f32.mrf.mxu0
    %v306 = vadd.f32 0.0, %v305
    %307 = vmatmul.bf16.gmra.mxu0 %v286
    %v308 = vpop.f32.mrf.mxu0
    %v309 = vadd.f32 0.0, %v308
    %v310 = vpop.f32.mrf.mxu0
    %v311 = vadd.f32 0.0, %v310
    %312 = vmatmul.bf16.gmra.mxu0 %v289
    %v313 = vpop.f32.mrf.mxu0
    %v314 = vadd.f32 0.0, %v313
    %v315 = vpop.f32.mrf.mxu0
    %316 = vdwg.mxu0
    %v317 = vadd.f32 %v224, %v304
    %v318 = vadd.f32 %v226, %v306
    %v319 = vadd.f32 %v229, %v309
    %v320 = vadd.f32 %v231, %v311
    %v321 = vadd.f32 %v234, %v314
    %v322 = vld [vmem:[%s2] sm:$0x1]
    %v324 = vperm.slane %v322, 0
    %v326 = vadd.f32 %v317, %v324
    %v327 = vadd.f32 %v318, %v324
    %v328 = vadd.f32 %v319, %v324
    %v329 = vadd.f32 %v320, %v324
    %v330 = vadd.f32 %v321, %v324
    %v331 = vmax.f32 %v326, 0.0
    %v332 = vmax.f32 %v327, 0.0
    %v333 = vmax.f32 %v328, 0.0
    %v334 = vmax.f32 %v329, 0.0
    %v335 = vmax.f32 %v330, 0.0
    %341 = vrot.lane.b32.xlu0 %v331, 64
    %v342 = vpop.permute.xlu0 %341
    %343 = vrot.lane.b32.xlu0 %v332, 64
    %v344 = vpop.permute.xlu0 %343
    %345 = vrot.lane.b32.xlu0 %v333, 64
    %v346 = vpop.permute.xlu0 %345
    %347 = vrot.lane.b32.xlu0 %v334, 64
    %v348 = vpop.permute.xlu0 %347
    %349 = vrot.lane.b32.xlu0 %v335, 64
    %v350 = vpop.permute.xlu0 %349
    %v356 = vmax.f32 %v331, %v342
    %v357 = vmax.f32 %v332, %v344
    %v358 = vmax.f32 %v333, %v346
    %v359 = vmax.f32 %v334, %v348
    %v360 = vmax.f32 %v335, %v350
    %vm361 = vcmask 523264
    %362 = vst.msk [vmem:[#allocation3] sm:$0xff] %vm361, %v356
    %363 = vst.msk [vmem:[#allocation3 + $0x8] sm:$0xff] %vm361, %v357
    %364 = vst.msk [vmem:[#allocation3 + $0x10] sm:$0xff] %vm361, %v358
    %365 = vst.msk [vmem:[#allocation3 + $0x18] sm:$0xff] %vm361, %v359
    %vm366 = vcmask 517120
    %367 = vst.msk [vmem:[#allocation3 + $0x20] sm:$0x3] %vm366, %v360
    %v368 = vld [vmem:[#allocation3] ss:$2 sm:$0xff]
    %s369 = scalar_lea.vmem [#allocation3], 16
    %v370 = vld [vmem:[%s369] ss:$2 sm:$0xff]
    %s371 = scalar_lea.vmem [#allocation3], 32
    %v372 = vld [vmem:[%s371] ss:$2 sm:$0x1]
    %s373 = scalar_lea.vmem [#allocation3], 1
    %v374 = vld [vmem:[%s373] ss:$2 sm:$0xff]
    %s375 = scalar_lea.vmem [#allocation3], 17
    %v376 = vld [vmem:[%s375] ss:$2 sm:$0xff]
    %s377 = scalar_lea.vmem [#allocation3], 33
    %v378 = vld [vmem:[%s377] ss:$2 sm:$0x1]
    %v379 = vmax.f32 %v368, %v374
    %v380 = vmax.f32 %v370, %v376
    %v381 = vmax.f32 %v372, %v378
    %383 = vrot.lane.b32.xlu0 %v379, 8
    %v384 = vpop.permute.xlu0 %383
    %vm386 = vcmask 588864
    %387 = vst.msk [vmem:[#allocation4 + $0x1] sm:$0xff] %vm386, %v384
    %390 = vrot.lane.b32.xlu0 %v380, 8
    %v391 = vpop.permute.xlu0 %390
    %392 = vrot.lane.b32.xlu0 %v381, 8
    %v393 = vpop.permute.xlu0 %392
    %vm396 = vcmask 588865
    %397 = vst.msk [vmem:[#allocation4 + $0xa] sm:$0xfe] %vm396, %v391
    %vm398 = vcmask 581696
    %399 = vst.msk [vmem:[#allocation4 + $0x12] sm:$0x1] %vm398, %v393
    %v400 = vld [vmem:[#allocation4] sm:$0xff]
    %v401 = vld [vmem:[#allocation4 + $0x8] sm:$0xff]
    %v402 = vld [vmem:[#allocation4 + $0x10] sm:$0x3]
    %v403 = vpack.c.bf16 %v401, %v400
    %v404 = vpack.c.bf16 %v402, %v402
    %v405 = vld [vmem:[%s3] sm:$0xf]
    %v406 = vld [vmem:[%s3 + $0x4] sm:$0xf]
    %v407 = vld [vmem:[%s3 + $0x8] sm:$0xf]
    %v408 = vld [vmem:[%s3 + $0xc] sm:$0xf]
    %v409 = vld [vmem:[%s3 + $0x10] sm:$0xf]
    %v410 = vld [vmem:[%s3 + $0x14] sm:$0xf]
    %v411 = vld [vmem:[%s3 + $0x18] sm:$0xf]
    %v412 = vld [vmem:[%s3 + $0x1c] sm:$0xf]
    %v413 = vld [vmem:[%s3 + $0x20] sm:$0xf]
    %v414 = vld [vmem:[%s3 + $0x24] sm:$0xf]
    %v415 = vld [vmem:[#allocation4 + $0x1] sm:$0xff]
    %v416 = vld [vmem:[#allocation4 + $0x9] sm:$0xff]
    %v417 = vld [vmem:[#allocation4 + $0x11] sm:$0x3]
    %v418 = vpack.c.bf16 %v416, %v415
    %v419 = vpack.c.bf16 %v417, %v417
    %s420 = scalar_lea.vmem %s3, 40
    %v421 = vld [vmem:[%s420] sm:$0xf]
    %v422 = vld [vmem:[%s420 + $0x4] sm:$0xf]
    %v423 = vld [vmem:[%s420 + $0x8] sm:$0xf]
    %v424 = vld [vmem:[%s420 + $0xc] sm:$0xf]
    %v425 = vld [vmem:[%s420 + $0x10] sm:$0xf]
    %v426 = vld [vmem:[%s420 + $0x14] sm:$0xf]
    %v427 = vld [vmem:[%s420 + $0x18] sm:$0xf]
    %v428 = vld [vmem:[%s420 + $0x1c] sm:$0xf]
    %v429 = vld [vmem:[%s420 + $0x20] sm:$0xf]
    %v430 = vld [vmem:[%s420 + $0x24] sm:$0xf]
    %v441 = vunpack.c.l.b16 %v421
    %v442 = vunpack.c.l.b16 %v422
    %v443 = vunpack.c.l.b16 %v423
    %v444 = vunpack.c.l.b16 %v424
    %v445 = vunpack.c.l.b16 %v425
    %v446 = vunpack.c.l.b16 %v426
    %v447 = vunpack.c.l.b16 %v427
    %v448 = vunpack.c.l.b16 %v428
    %v449 = vunpack.c.l.b16 %v429
    %v450 = vunpack.c.l.b16 %v430
    %v451 = vpack.c.b16 %v442, %v441
    %v452 = vpack.c.b16 %v444, %v443
    %v453 = vpack.c.b16 %v446, %v445
    %v454 = vpack.c.b16 %v448, %v447
    %v455 = vpack.c.b16 %v450, %v449
    %vm461 = vcmask 654336
    %v463 = vsel %vm461, %v418, 0
    %v466 = vsel %vm461, %v419, 0
    %468 = vmatpush.bf16.msra.mxu0 0
    %469 = vmatpush.bf16.msra.mxu0 0
    %470 = vmatpush.bf16.msra.mxu0 0
    %471 = vmatpush.bf16.msra.mxu0 %v455
    %472 = vmatpush.bf16.msra.mxu0 %v454
    %473 = vmatpush.bf16.msra.mxu0 %v453
    %474 = vmatpush.bf16.msra.mxu0 %v452
    %475 = vmatpush.bf16.msra.mxu0 %v451
    %476 = vmatmul.bf16.gmra.mxu0 %v463
    %v477 = vpop.f32.mrf.mxu0
    %v478 = vadd.f32 0.0, %v477
    %v479 = vpop.f32.mrf.mxu0
    %v480 = vadd.f32 0.0, %v479
    %481 = vmatmul.bf16.gmra.mxu0 %v466
    %v482 = vpop.f32.mrf.mxu0
    %v483 = vadd.f32 0.0, %v482
    %v484 = vpop.f32.mrf.mxu0
    %485 = vdwg.mxu0
    %v496 = vunpack.c.l.b16 %v405
    %v497 = vunpack.c.l.b16 %v406
    %v498 = vunpack.c.l.b16 %v407
    %v499 = vunpack.c.l.b16 %v408
    %v500 = vunpack.c.l.b16 %v409
    %v501 = vunpack.c.l.b16 %v410
    %v502 = vunpack.c.l.b16 %v411
    %v503 = vunpack.c.l.b16 %v412
    %v504 = vunpack.c.l.b16 %v413
    %v505 = vunpack.c.l.b16 %v414
    %v506 = vpack.c.b16 %v497, %v496
    %v507 = vpack.c.b16 %v499, %v498
    %v508 = vpack.c.b16 %v501, %v500
    %v509 = vpack.c.b16 %v503, %v502
    %v510 = vpack.c.b16 %v505, %v504
    %v517 = vsel %vm461, %v403, 0
    %v520 = vsel %vm461, %v404, 0
    %522 = vmatpush.bf16.msra.mxu0 0
    %523 = vmatpush.bf16.msra.mxu0 0
    %524 = vmatpush.bf16.msra.mxu0 0
    %525 = vmatpush.bf16.msra.mxu0 %v510
    %526 = vmatpush.bf16.msra.mxu0 %v509
    %527 = vmatpush.bf16.msra.mxu0 %v508
    %528 = vmatpush.bf16.msra.mxu0 %v507
    %529 = vmatpush.bf16.msra.mxu0 %v506
    %530 = vmatmul.bf16.gmra.mxu0 %v517
    %v531 = vpop.f32.mrf.mxu0
    %v532 = vadd.f32 %v478, %v531
    %v533 = vpop.f32.mrf.mxu0
    %v534 = vadd.f32 %v480, %v533
    %535 = vmatmul.bf16.gmra.mxu0 %v520
    %v536 = vpop.f32.mrf.mxu0
    %v537 = vadd.f32 %v483, %v536
    %v538 = vpop.f32.mrf.mxu0
    %539 = vdwg.mxu0
    %v540 = vld [vmem:[#allocation4 + $0x2] sm:$0xff]
    %v541 = vld [vmem:[#allocation4 + $0xa] sm:$0xff]
    %v542 = vld [vmem:[#allocation4 + $0x12] sm:$0x3]
    %v543 = vpack.c.bf16 %v541, %v540
    %v544 = vpack.c.bf16 %v542, %v542
    %s545 = scalar_lea.vmem %s3, 80
    %v546 = vld [vmem:[%s545] sm:$0xf]
    %v547 = vld [vmem:[%s545 + $0x4] sm:$0xf]
    %v548 = vld [vmem:[%s545 + $0x8] sm:$0xf]
    %v549 = vld [vmem:[%s545 + $0xc] sm:$0xf]
    %v550 = vld [vmem:[%s545 + $0x10] sm:$0xf]
    %v551 = vld [vmem:[%s545 + $0x14] sm:$0xf]
    %v552 = vld [vmem:[%s545 + $0x18] sm:$0xf]
    %v553 = vld [vmem:[%s545 + $0x1c] sm:$0xf]
    %v554 = vld [vmem:[%s545 + $0x20] sm:$0xf]
    %v555 = vld [vmem:[%s545 + $0x24] sm:$0xf]
    %v566 = vunpack.c.l.b16 %v546
    %v567 = vunpack.c.l.b16 %v547
    %v568 = vunpack.c.l.b16 %v548
    %v569 = vunpack.c.l.b16 %v549
    %v570 = vunpack.c.l.b16 %v550
    %v571 = vunpack.c.l.b16 %v551
    %v572 = vunpack.c.l.b16 %v552
    %v573 = vunpack.c.l.b16 %v553
    %v574 = vunpack.c.l.b16 %v554
    %v575 = vunpack.c.l.b16 %v555
    %v576 = vpack.c.b16 %v567, %v566
    %v577 = vpack.c.b16 %v569, %v568
    %v578 = vpack.c.b16 %v571, %v570
    %v579 = vpack.c.b16 %v573, %v572
    %v580 = vpack.c.b16 %v575, %v574
    %v587 = vsel %vm461, %v543, 0
    %v590 = vsel %vm461, %v544, 0
    %592 = vmatpush.bf16.msra.mxu0 0
    %593 = vmatpush.bf16.msra.mxu0 0
    %594 = vmatpush.bf16.msra.mxu0 0
    %595 = vmatpush.bf16.msra.mxu0 %v580
    %596 = vmatpush.bf16.msra.mxu0 %v579
    %597 = vmatpush.bf16.msra.mxu0 %v578
    %598 = vmatpush.bf16.msra.mxu0 %v577
    %599 = vmatpush.bf16.msra.mxu0 %v576
    %600 = vmatmul.bf16.gmra.mxu0 %v587
    %v601 = vpop.f32.mrf.mxu0
    %v602 = vadd.f32 0.0, %v601
    %v603 = vpop.f32.mrf.mxu0
    %v604 = vadd.f32 0.0, %v603
    %605 = vmatmul.bf16.gmra.mxu0 %v590
    %v606 = vpop.f32.mrf.mxu0
    %v607 = vadd.f32 0.0, %v606
    %v608 = vpop.f32.mrf.mxu0
    %609 = vdwg.mxu0
    %v610 = vadd.f32 %v532, %v602
    %v611 = vadd.f32 %v534, %v604
    %v612 = vadd.f32 %v537, %v607
    %v613 = vld [vmem:[%s4] sm:$0x1]
    %v615 = vperm.slane %v613, 0
    %v617 = vadd.f32 %v610, %v615
    %v618 = vadd.f32 %v611, %v615
    %v619 = vadd.f32 %v612, %v615
    %v620 = vmax.f32 %v617, 0.0
    %v621 = vmax.f32 %v618, 0.0
    %v622 = vmax.f32 %v619, 0.0
    %626 = vrot.lane.b32.xlu0 %v620, 64
    %v627 = vpop.permute.xlu0 %626
    %628 = vrot.lane.b32.xlu0 %v621, 64
    %v629 = vpop.permute.xlu0 %628
    %630 = vrot.lane.b32.xlu0 %v622, 64
    %v631 = vpop.permute.xlu0 %630
    %v635 = vmax.f32 %v620, %v627
    %v636 = vmax.f32 %v621, %v629
    %v637 = vmax.f32 %v622, %v631
    %638 = vst.msk [vmem:[#allocation5] sm:$0xff] %vm361, %v635
    %639 = vst.msk [vmem:[#allocation5 + $0x8] sm:$0xff] %vm361, %v636
    %640 = vst.msk [vmem:[#allocation5 + $0x10] sm:$0x3] %vm366, %v637
    %v641 = vld [vmem:[#allocation5] ss:$2 sm:$0xff]
    %s642 = scalar_lea.vmem [#allocation5], 16
    %v643 = vld [vmem:[%s642] ss:$2 sm:$0x1]
    %s644 = scalar_lea.vmem [#allocation5], 1
    %v645 = vld [vmem:[%s644] ss:$2 sm:$0xff]
    %s646 = scalar_lea.vmem [#allocation5], 17
    %v647 = vld [vmem:[%s646] ss:$2 sm:$0x1]
    %v648 = vmax.f32 %v641, %v645
    %v649 = vmax.f32 %v643, %v647
    %v651 = vrot.slane %v648, 4
    %vm653 = vcmask 1040384
    %v654 = vsel %vm653, %v648, %v651
    %v655 = vrot.slane %v648, 1
    %v657 = vrot.slane %v648, 5
    %v659 = vsel %vm653, %v655, %v657
    %v660 = vrot.slane %v648, 2
    %v662 = vrot.slane %v648, 6
    %v664 = vsel %vm653, %v660, %v662
    %v665 = vrot.slane %v648, 3
    %v668 = vrot.slane %v649, 7
    %v670 = vsel %vm653, %v665, %v668
    %672 = vrot.lane.b32.xlu0 %v659, 64
    %v673 = vpop.permute.xlu0 %672
    %676 = vrot.lane.b32.xlu0 %v670, 64
    %v677 = vpop.permute.xlu0 %676
    %v679 = vsel %vm361, %v654, %v673
    %v680 = vsel %vm361, %v664, %v677
    %v681 = vpack.c.bf16 %v679, %v679
    %v682 = vpack.c.bf16 %v680, %v680
    %v683 = vld [vmem:[%s5] sm:$0xf]
    %v684 = vld [vmem:[%s5 + $0x4] sm:$0xf]
    %v685 = vld [vmem:[%s5 + $0x8] sm:$0xf]
    %v686 = vld [vmem:[%s5 + $0xc] sm:$0xf]
    %v687 = vld [vmem:[%s5 + $0x10] sm:$0xf]
    %v688 = vld [vmem:[%s5 + $0x14] sm:$0xf]
    %v689 = vld [vmem:[%s5 + $0x18] sm:$0xf]
    %v690 = vld [vmem:[%s5 + $0x1c] sm:$0xf]
    %v691 = vld [vmem:[%s5 + $0x20] sm:$0xf]
    %v692 = vld [vmem:[%s5 + $0x24] sm:$0xf]
    %v693 = vld [vmem:[%s5 + $0x28] sm:$0xf]
    %v694 = vld [vmem:[%s5 + $0x2c] sm:$0xf]
    %v695 = vld [vmem:[%s5 + $0x30] sm:$0xf]
    %v696 = vld [vmem:[%s5 + $0x34] sm:$0xf]
    %v697 = vld [vmem:[%s5 + $0x38] sm:$0xf]
    %v698 = vld [vmem:[%s5 + $0x3c] sm:$0xf]
    %v699 = vld [vmem:[%s5 + $0x40] sm:$0xf]
    %v700 = vld [vmem:[%s5 + $0x44] sm:$0xf]
    %v701 = vld [vmem:[%s5 + $0x48] sm:$0xf]
    %v702 = vld [vmem:[%s5 + $0x4c] sm:$0xf]
    %v703 = vld [vmem:[%s5 + $0x50] sm:$0xf]
    %v704 = vld [vmem:[%s5 + $0x54] sm:$0xf]
    %v705 = vld [vmem:[%s5 + $0x58] sm:$0xf]
    %v706 = vld [vmem:[%s5 + $0x5c] sm:$0xf]
    %v707 = vld [vmem:[%s5 + $0x60] sm:$0xf]
    %v708 = vld [vmem:[%s5 + $0x64] sm:$0xf]
    %v709 = vld [vmem:[%s5 + $0x68] sm:$0xf]
    %v710 = vld [vmem:[%s5 + $0x6c] sm:$0xf]
    %v711 = vld [vmem:[%s5 + $0x70] sm:$0xf]
    %v712 = vld [vmem:[%s5 + $0x74] sm:$0xf]
    %v713 = vld [vmem:[%s5 + $0x78] sm:$0xf]
    %v714 = vld [vmem:[%s5 + $0x7c] sm:$0xf]
    %v715 = vld [vmem:[%s6] sm:$0x1]
    %v717 = vperm.slane %v715, 0
    %v751 = vunpack.c.l.b16 %v683
    %v752 = vunpack.c.l.b16 %v684
    %v753 = vunpack.c.l.b16 %v685
    %v754 = vunpack.c.l.b16 %v686
    %v755 = vunpack.c.l.b16 %v687
    %v756 = vunpack.c.l.b16 %v688
    %v757 = vunpack.c.l.b16 %v689
    %v758 = vunpack.c.l.b16 %v690
    %v759 = vunpack.c.l.b16 %v691
    %v760 = vunpack.c.l.b16 %v692
    %v761 = vunpack.c.l.b16 %v693
    %v762 = vunpack.c.l.b16 %v694
    %v763 = vunpack.c.l.b16 %v695
    %v764 = vunpack.c.l.b16 %v696
    %v765 = vunpack.c.l.b16 %v697
    %v766 = vunpack.c.l.b16 %v698
    %v767 = vunpack.c.l.b16 %v699
    %v768 = vunpack.c.l.b16 %v700
    %v769 = vunpack.c.l.b16 %v701
    %v770 = vunpack.c.l.b16 %v702
    %v771 = vunpack.c.l.b16 %v703
    %v772 = vunpack.c.l.b16 %v704
    %v773 = vunpack.c.l.b16 %v705
    %v774 = vunpack.c.l.b16 %v706
    %v775 = vunpack.c.l.b16 %v707
    %v776 = vunpack.c.l.b16 %v708
    %v777 = vunpack.c.l.b16 %v709
    %v778 = vunpack.c.l.b16 %v710
    %v779 = vunpack.c.l.b16 %v711
    %v780 = vunpack.c.l.b16 %v712
    %v781 = vunpack.c.l.b16 %v713
    %v782 = vunpack.c.l.b16 %v714
    %v783 = vpack.c.b16 %v752, %v751
    %v784 = vpack.c.b16 %v754, %v753
    %v785 = vpack.c.b16 %v756, %v755
    %v786 = vpack.c.b16 %v758, %v757
    %v787 = vpack.c.b16 %v760, %v759
    %v788 = vpack.c.b16 %v762, %v761
    %v789 = vpack.c.b16 %v764, %v763
    %v790 = vpack.c.b16 %v766, %v765
    %v791 = vpack.c.b16 %v768, %v767
    %v792 = vpack.c.b16 %v770, %v769
    %v793 = vpack.c.b16 %v772, %v771
    %v794 = vpack.c.b16 %v774, %v773
    %v795 = vpack.c.b16 %v776, %v775
    %v796 = vpack.c.b16 %v778, %v777
    %v797 = vpack.c.b16 %v780, %v779
    %v798 = vpack.c.b16 %v782, %v781
    %815 = vmatpush.bf16.msra.mxu0 %v790
    %816 = vmatpush.bf16.msra.mxu0 %v789
    %817 = vmatpush.bf16.msra.mxu0 %v788
    %818 = vmatpush.bf16.msra.mxu0 %v787
    %819 = vmatpush.bf16.msra.mxu0 %v786
    %820 = vmatpush.bf16.msra.mxu0 %v785
    %821 = vmatpush.bf16.msra.mxu0 %v784
    %822 = vmatpush.bf16.msra.mxu0 %v783
    %823 = vmatmul.bf16.gmra.mxu0 %v681
    %v824 = vpop.f32.mrf.mxu0
    %v825 = vadd.f32 %v717, %v824
    %v826 = vpop.f32.mrf.mxu0
    %827 = vdwg.mxu0
    %828 = vmatpush.bf16.msra.mxu0 %v798
    %829 = vmatpush.bf16.msra.mxu0 %v797
    %830 = vmatpush.bf16.msra.mxu0 %v796
    %831 = vmatpush.bf16.msra.mxu0 %v795
    %832 = vmatpush.bf16.msra.mxu0 %v794
    %833 = vmatpush.bf16.msra.mxu0 %v793
    %834 = vmatpush.bf16.msra.mxu0 %v792
    %835 = vmatpush.bf16.msra.mxu0 %v791
    %836 = vmatmul.bf16.gmra.mxu0 %v682
    %v837 = vpop.f32.mrf.mxu0
    %v838 = vadd.f32 %v825, %v837
    %v839 = vpop.f32.mrf.mxu0
    %840 = vdwg.mxu0
    %v841 = vmax.f32 %v838, 0.0
    %v842 = vpack.c.bf16 %v841, %v841
    %v843 = vld [vmem:[%s7] sm:$0xf]
    %v844 = vld [vmem:[%s7 + $0x4] sm:$0xf]
    %v845 = vld [vmem:[%s7 + $0x8] sm:$0xf]
    %v846 = vld [vmem:[%s7 + $0xc] sm:$0xf]
    %v847 = vld [vmem:[%s8] sm:$0x1]
    %v849 = vperm.slane %v847, 0
    %v855 = vunpack.c.l.b16 %v843
    %v856 = vunpack.c.l.b16 %v844
    %v857 = vunpack.c.l.b16 %v845
    %v858 = vunpack.c.l.b16 %v846
    %v859 = vpack.c.b16 %v856, %v855
    %v860 = vpack.c.b16 %v858, %v857
    %vm863 = vcmask 261120
    %v865 = vsel %vm863, %v842, 0
    %867 = vmatpush.bf16.msra.mxu0 0
    %868 = vmatpush.bf16.msra.mxu0 0
    %869 = vmatpush.bf16.msra.mxu0 0
    %870 = vmatpush.bf16.msra.mxu0 0
    %871 = vmatpush.bf16.msra.mxu0 0
    %872 = vmatpush.bf16.msra.mxu0 0
    %873 = vmatpush.bf16.msra.mxu0 %v860
    %874 = vmatpush.bf16.msra.mxu0 %v859
    %875 = vmatmul.bf16.gmra.mxu0 %v865
    %v876 = vpop.f32.mrf.mxu0
    %v877 = vadd.f32 %v849, %v876
    %v878 = vpop.f32.mrf.mxu0
    %879 = vdwg.mxu0
    %880 = vst [vmem:[#allocation6] sm:$0x3] %v877
    // Predicated region
    $region42: #{custom_cnn_forward.1} parent=1 // pred_check
      _
    $region43: #{custom_cnn_forward.1} parent=1 // pred_check_branch
      %882 = sbr.rel (0) target = $region45
    $region44: #{custom_cnn_forward.1} parent=1 // pred_region
      %884 = vsyncadd [#allocation7], 0
      %s886 = sshll.u32 [#allocation6], 4
      %s887 = int_to_ptr.vmem [resolvable:$true] %s886
      %s888 = sshll.u32 %s9, 4
      %s889 = int_to_ptr.hbm [resolvable:$true] %s888
      %891 = dma.vmem_to_hbm [thread:$0]  %s887, 32, %s889, [#allocation7]
    $region45: #{custom_cnn_forward.1} parent=1 // pred_fallthru
      _
    // Predicated region
    $region46: #{custom_cnn_forward.1} parent=1 // pred_check
      _
    $region47: #{custom_cnn_forward.1} parent=1 // pred_check_branch
      %893 = sbr.rel (0) target = $region49
    $region48: #{custom_cnn_forward.1} parent=1 // pred_region
      %895 = dma.done [#allocation7], 32
    $region49: #{custom_cnn_forward.1} parent=1 // pred_fallthru
      _
    %896 = vsyncpa [#allocation7], 1

</llo_original>
